<compile_context>
chip_gen: v7x
topology: tpu7x:2x2x1
jax: 0.10.0
libtpu: 0.0.40
codegen_flags: <defaults>
</compile_context>

<pallas_src>
import jax
import jax.numpy as jnp
from jax.experimental import pallas as pl
from jax.experimental.pallas import tpu as pltpu

_NOUT_PAD = 128                    # lane-dense padded width of the final layer
_VMEM_BUDGET = 40 * 1024 * 1024    # budget for the double-buffered x/out streams
_VMEM_LIMIT = 48 * 1024 * 1024     # explicit scoped-VMEM limit (safe on v5e/v6e/v7x)


def _round_up(n, m):
    return ((n + m - 1) // m) * m


def _pick_tile_b(batch, n_features, target=1024, budget_bytes=_VMEM_BUDGET):
    """Largest batch tile (multiple of 8 sublanes) that keeps the double-buffered
    bf16 x-stream + f32 output slab inside the VMEM budget."""
    per_row = 2 * (n_features * 2 + _NOUT_PAD * 4)   # 2x = double buffering
    max_rows = max(8, budget_bytes // max(per_row, 1))
    tile = min(target, max_rows, _round_up(batch, 8))
    return _round_up(max(tile, 8), 8)


def nnet_kernel(x_ref, w0_ref, b0_ref, w1_ref, b1_ref, w2_ref, b2_ref, o_ref):
    # ---- hidden0: Linear(F, 60) + LeakyReLU(0.2) ----
    # bf16 operands, f32 accumulation on the MXU; epilogue in f32.
    h0 = jnp.dot(x_ref[...], w0_ref[...], preferred_element_type=jnp.float32)
    h0 = h0 + b0_ref[...]                       # (1, 60) broadcasts over batch tile
    h0 = jnp.where(h0 > 0, h0, 0.2 * h0)
    # TODO(synk): Dropout omitted (eval-mode identity); training-mode masking
    # would use pltpu.prng_seed + pltpu.prng_random_bits.

    # ---- hidden1: Linear(60, 10) + LeakyReLU(0.2) ----
    h1 = jnp.dot(h0.astype(jnp.bfloat16), w1_ref[...],
                 preferred_element_type=jnp.float32)
    h1 = h1 + b1_ref[...]                       # (1, 10)
    h1 = jnp.where(h1 > 0, h1, 0.2 * h1)

    # ---- out: Linear(10, 1), padded to 128 lanes (column 0 is the real output) ----
    y = jnp.dot(h1.astype(jnp.bfloat16), w2_ref[...],
                preferred_element_type=jnp.float32)
    y = y + b2_ref[0, 0]                        # SMEM scalar bias
    o_ref[...] = y                              # lane-dense (TILE_B, 128) store


def nnet_forward(x, params, *, tile_b=None):
    """x: [B, F] float32. Returns [B, 1] float32 (eval-mode forward)."""
    w0, b0, w1, b1, w2, b2 = params
    B, F = x.shape
    H0 = w0.shape[1]   # 60
    H1 = w1.shape[1]   # 10

    if tile_b is None:
        tile_b = _pick_tile_b(B, F)
    else:
        tile_b = _round_up(max(8, min(tile_b, _round_up(B, 8))), 8)

    B_pad = _round_up(B, tile_b)
    if B_pad != B:
        x = jnp.pad(x, ((0, B_pad - B), (0, 0)))

    # bf16 matmul operands; biases stay f32 for the VPU epilogue.
    x_bf = x.astype(jnp.bfloat16)
    w0_bf = w0.astype(jnp.bfloat16)
    w1_bf = w1.astype(jnp.bfloat16)
    # Pad the last layer's weight to 128 output lanes (zeros beyond column 0).
    w2_pad = jnp.zeros((H1, _NOUT_PAD), jnp.float32).at[:, 0:1].set(w2)
    w2_pad = w2_pad.astype(jnp.bfloat16)
    b2_s = b2.reshape(1, 1).astype(jnp.float32)   # SMEM scalar

    grid = (B_pad // tile_b,)

    out_slab = pl.pallas_call(
        nnet_kernel,
        out_shape=jax.ShapeDtypeStruct((B_pad, _NOUT_PAD), jnp.float32),
        grid_spec=pltpu.PrefetchScalarGridSpec(
            num_scalar_prefetch=0,
            grid=grid,
            in_specs=[
                pl.BlockSpec((tile_b, F), lambda i: (i, 0)),        # x (streamed)
                pl.BlockSpec((F, H0), lambda i: (0, 0)),            # w0 (resident)
                pl.BlockSpec((1, H0), lambda i: (0, 0)),            # b0
                pl.BlockSpec((H0, H1), lambda i: (0, 0)),           # w1
                pl.BlockSpec((1, H1), lambda i: (0, 0)),            # b1
                pl.BlockSpec((H1, _NOUT_PAD), lambda i: (0, 0)),    # w2 (padded)
                pl.BlockSpec(memory_space=pltpu.MemorySpace.SMEM),  # b2 scalar
            ],
            out_specs=pl.BlockSpec((tile_b, _NOUT_PAD), lambda i: (i, 0)),
        ),
        compiler_params=pltpu.CompilerParams(
            dimension_semantics=("parallel",),   # megacore sharding on v7x
            vmem_limit_bytes=_VMEM_LIMIT,
        ),
    )(x_bf, w0_bf, b0, w1_bf, b1, w2_pad, b2_s)

    return out_slab[:B, 0:1]


def init_params(key, n_features):
    """Deterministic init mimicking PyTorch nn.Linear default
    (uniform(-1/sqrt(fan_in), 1/sqrt(fan_in))). Weights stored as [in, out]."""
    def linear_init(k, fan_in, fan_out):
        kw, kb = jax.random.split(k)
        bound = 1.0 / (fan_in ** 0.5)
        w = jax.random.uniform(kw, (fan_in, fan_out), jnp.float32, -bound, bound)
        b = jax.random.uniform(kb, (1, fan_out), jnp.float32, -bound, bound)
        return w, b

    k0, k1, k2 = jax.random.split(key, 3)
    w0, b0 = linear_init(k0, n_features, 60)
    w1, b1 = linear_init(k1, 60, 10)
    w2, b2 = linear_init(k2, 10, 1)
    return (w0, b0, w1, b1, w2, b2)


def nnet_reference(x, params):
    """Pure-JAX reference mirroring the kernel's bf16-operand / f32-accumulate math."""
    w0, b0, w1, b1, w2, b2 = params

    def mm(a, w):
        return jnp.dot(a.astype(jnp.bfloat16), w.astype(jnp.bfloat16),
                       preferred_element_type=jnp.float32)

    h0 = mm(x, w0) + b0
    h0 = jnp.where(h0 > 0, h0, 0.2 * h0)
    h1 = mm(h0, w1) + b1
    h1 = jnp.where(h1 > 0, h1, 0.2 * h1)
    return mm(h1, w2) + b2


if __name__ == "__main__":
    key = jax.random.PRNGKey(0)
    k_x, k_p, k_x2 = jax.random.split(key, 3)

    batch = 8
    n_features = 32   # "size" = X.shape[1] in the original script

    x = jax.random.normal(k_x, (batch, n_features), dtype=jnp.float32)
    params = init_params(k_p, n_features)

    # Single-tile path (tiny batch).
    out = jax.block_until_ready(nnet_forward(x, params))
    ref = nnet_reference(x, params)
    assert out.shape == (batch, 1)
    assert jnp.allclose(out, ref, atol=2e-3, rtol=2e-3), "mismatch vs reference (small batch)"

    # Multi-tile path: forces >1 grid step and internal batch padding.
    batch2 = 300
    x2 = jax.random.normal(k_x2, (batch2, n_features), dtype=jnp.float32)
    out2 = jax.block_until_ready(nnet_forward(x2, params, tile_b=128))
    ref2 = nnet_reference(x2, params)
    assert out2.shape == (batch2, 1)
    assert jnp.allclose(out2, ref2, atol=2e-3, rtol=2e-3), "mismatch vs reference (gridded batch)"

    print("KERNEL_OK")
</pallas_src>

<mosaic_0001>
module attributes {stable_mosaic.version = 11 : i64} {
  func.func @nnet_kernel(%arg0: i32, %arg1: memref<8x32xbf16, #tpu.memory_space<vmem>>, %arg2: memref<32x60xbf16, #tpu.memory_space<vmem>>, %arg3: memref<1x60xf32, #tpu.memory_space<vmem>>, %arg4: memref<60x10xbf16, #tpu.memory_space<vmem>>, %arg5: memref<1x10xf32, #tpu.memory_space<vmem>>, %arg6: memref<10x128xbf16, #tpu.memory_space<vmem>>, %arg7: memref<1x1xf32, #tpu.memory_space<smem>>, %arg8: memref<8x128xf32, #tpu.memory_space<vmem>>) attributes {dimension_semantics = [#tpu.dimension_semantics<parallel>], iteration_bounds = array<i64: 1>, scalar_prefetch = 0 : i64, scratch_operands = 0 : i64, tpu.core_type = #tpu.core_type<tc>, window_params = [{transform_indices = @transform_0, window_bounds = array<i64: 8, 32>}, {pipeline_mode = #tpu.pipeline_mode<synchronous>, transform_indices = @transform_1, window_bounds = array<i64: 32, 60>}, {pipeline_mode = #tpu.pipeline_mode<synchronous>, transform_indices = @transform_2, window_bounds = array<i64: 1, 60>}, {pipeline_mode = #tpu.pipeline_mode<synchronous>, transform_indices = @transform_3, window_bounds = array<i64: 60, 10>}, {pipeline_mode = #tpu.pipeline_mode<synchronous>, transform_indices = @transform_4, window_bounds = array<i64: 1, 10>}, {pipeline_mode = #tpu.pipeline_mode<synchronous>, transform_indices = @transform_5, window_bounds = array<i64: 10, 128>}, {transform_indices = @transform_6, window_bounds = array<i64: 1, 1>}, {transform_indices = @transform_7, window_bounds = array<i64: 8, 128>}]} {
    %c0 = arith.constant 0 : index
    %c0_0 = arith.constant 0 : index
    %0 = vector.load %arg1[%c0, %c0_0] : memref<8x32xbf16, #tpu.memory_space<vmem>>, vector<8x32xbf16>
    %c0_1 = arith.constant 0 : index
    %c0_2 = arith.constant 0 : index
    %1 = vector.load %arg2[%c0_1, %c0_2] : memref<32x60xbf16, #tpu.memory_space<vmem>>, vector<32x60xbf16>
    %cst = arith.constant dense<0.000000e+00> : vector<8x60xf32>
    %2 = tpu.matmul %0, %1, %cst {dimension_numbers = #tpu.dot_dimension_numbers<[1], [0], [0], [1], [0, 0, 1, 1], [], []>} : vector<8x32xbf16>, vector<32x60xbf16>, vector<8x60xf32> -> vector<8x60xf32>
    %c0_3 = arith.constant 0 : index
    %c0_4 = arith.constant 0 : index
    %3 = vector.load %arg3[%c0_3, %c0_4] : memref<1x60xf32, #tpu.memory_space<vmem>>, vector<1x60xf32>
    %4 = vector.broadcast %3 : vector<1x60xf32> to vector<8x60xf32>
    %5 = arith.addf %2, %4 : vector<8x60xf32>
    %cst_5 = arith.constant 0.000000e+00 : f32
    %6 = vector.broadcast %cst_5 : f32 to vector<8x60xf32>
    %7 = arith.cmpf ogt, %5, %6 : vector<8x60xf32>
    %cst_6 = arith.constant 2.000000e-01 : f32
    %8 = vector.broadcast %cst_6 : f32 to vector<8x60xf32>
    %9 = arith.mulf %8, %5 : vector<8x60xf32>
    %10 = arith.select %7, %5, %9 : vector<8x60xi1>, vector<8x60xf32>
    %11 = arith.truncf %10 : vector<8x60xf32> to vector<8x60xbf16>
    %c0_7 = arith.constant 0 : index
    %c0_8 = arith.constant 0 : index
    %12 = vector.load %arg4[%c0_7, %c0_8] : memref<60x10xbf16, #tpu.memory_space<vmem>>, vector<60x10xbf16>
    %cst_9 = arith.constant dense<0.000000e+00> : vector<8x10xf32>
    %13 = tpu.matmul %11, %12, %cst_9 {dimension_numbers = #tpu.dot_dimension_numbers<[1], [0], [0], [1], [0, 0, 1, 1], [], []>} : vector<8x60xbf16>, vector<60x10xbf16>, vector<8x10xf32> -> vector<8x10xf32>
    %c0_10 = arith.constant 0 : index
    %c0_11 = arith.constant 0 : index
    %14 = vector.load %arg5[%c0_10, %c0_11] : memref<1x10xf32, #tpu.memory_space<vmem>>, vector<1x10xf32>
    %15 = vector.broadcast %14 : vector<1x10xf32> to vector<8x10xf32>
    %16 = arith.addf %13, %15 : vector<8x10xf32>
    %cst_12 = arith.constant 0.000000e+00 : f32
    %17 = vector.broadcast %cst_12 : f32 to vector<8x10xf32>
    %18 = arith.cmpf ogt, %16, %17 : vector<8x10xf32>
    %cst_13 = arith.constant 2.000000e-01 : f32
    %19 = vector.broadcast %cst_13 : f32 to vector<8x10xf32>
    %20 = arith.mulf %19, %16 : vector<8x10xf32>
    %21 = arith.select %18, %16, %20 : vector<8x10xi1>, vector<8x10xf32>
    %22 = arith.truncf %21 : vector<8x10xf32> to vector<8x10xbf16>
    %c0_14 = arith.constant 0 : index
    %c0_15 = arith.constant 0 : index
    %23 = vector.load %arg6[%c0_14, %c0_15] : memref<10x128xbf16, #tpu.memory_space<vmem>>, vector<10x128xbf16>
    %cst_16 = arith.constant dense<0.000000e+00> : vector<8x128xf32>
    %24 = tpu.matmul %22, %23, %cst_16 {dimension_numbers = #tpu.dot_dimension_numbers<[1], [0], [0], [1], [0, 0, 1, 1], [], []>} : vector<8x10xbf16>, vector<10x128xbf16>, vector<8x128xf32> -> vector<8x128xf32>
    %c0_17 = arith.constant 0 : index
    %c0_18 = arith.constant 0 : index
    %25 = memref.load %arg7[%c0_17, %c0_18] : memref<1x1xf32, #tpu.memory_space<smem>>
    %26 = vector.broadcast %25 : f32 to vector<8x128xf32>
    %27 = arith.addf %24, %26 : vector<8x128xf32>
    %c0_19 = arith.constant 0 : index
    %c0_20 = arith.constant 0 : index
    %28 = vector.load %arg8[%c0_19, %c0_20] : memref<8x128xf32, #tpu.memory_space<vmem>>, vector<8x128xf32>
    tpu.vector_store %arg8[%c0_19, %c0_20], %27 {strides = array<i32>} : memref<8x128xf32, #tpu.memory_space<vmem>>, vector<8x128xf32>,
    return
  }
  func.func @transform_0(%arg0: i32) -> (i32, i32) {
    %c0_i32 = arith.constant 0 : i32
    %c0_i32_0 = arith.constant 0 : i32
    return %arg0, %c0_i32 : i32, i32
  }
  func.func @transform_1(%arg0: i32) -> (i32, i32) {
    %c0_i32 = arith.constant 0 : i32
    %c0_i32_0 = arith.constant 0 : i32
    %c0_i32_1 = arith.constant 0 : i32
    return %c0_i32, %c0_i32_0 : i32, i32
  }
  func.func @transform_2(%arg0: i32) -> (i32, i32) {
    %c0_i32 = arith.constant 0 : i32
    %c0_i32_0 = arith.constant 0 : i32
    %c0_i32_1 = arith.constant 0 : i32
    return %c0_i32, %c0_i32_0 : i32, i32
  }
  func.func @transform_3(%arg0: i32) -> (i32, i32) {
    %c0_i32 = arith.constant 0 : i32
    %c0_i32_0 = arith.constant 0 : i32
    %c0_i32_1 = arith.constant 0 : i32
    return %c0_i32, %c0_i32_0 : i32, i32
  }
  func.func @transform_4(%arg0: i32) -> (i32, i32) {
    %c0_i32 = arith.constant 0 : i32
    %c0_i32_0 = arith.constant 0 : i32
    %c0_i32_1 = arith.constant 0 : i32
    return %c0_i32, %c0_i32_0 : i32, i32
  }
  func.func @transform_5(%arg0: i32) -> (i32, i32) {
    %c0_i32 = arith.constant 0 : i32
    %c0_i32_0 = arith.constant 0 : i32
    %c0_i32_1 = arith.constant 0 : i32
    return %c0_i32, %c0_i32_0 : i32, i32
  }
  func.func @transform_6(%arg0: i32) -> (i32, i32) {
    %c0_i32 = arith.constant 0 : i32
    %c0_i32_0 = arith.constant 0 : i32
    %c0_i32_1 = arith.constant 0 : i32
    return %c0_i32, %c0_i32_0 : i32, i32
  }
  func.func @transform_7(%arg0: i32) -> (i32, i32) {
    %c0_i32 = arith.constant 0 : i32
    %c0_i32_0 = arith.constant 0 : i32
    return %arg0, %c0_i32 : i32, i32
  }
}

</mosaic_0001>

<llo_original>
// kernel: tpu_custom_call.1
$region0: #{tpu_custom_call.1}
  #allocation0 [shape = 'u32[]', space=smem, size = 0x4, offset = 0x4, fixed_abs, tag = 'smem constant byte address 0x4 - core index']
  #allocation1 [shape = 'u32[144,128]{1,0:T(1,128)}', space=vmem, size = 0x12000, scoped, tag = 'internal scratch']
  #allocation2 [shape = 'f32[1,1]{1,0:T(1,128)S(6)}', space=smem, size = 0x200, scoped, tag = 'scoped memory for tpu_custom_call.1']
  %s0 = inlined_call_operand.vmem [shape: bf16[8,32], index: 0, kind: input, shape index: {}]
  %s1 = inlined_call_operand.vmem [shape: bf16[32,60], index: 1, kind: input, shape index: {}]
  %s2 = inlined_call_operand.vmem [shape: f32[1,60], index: 2, kind: input, shape index: {}]
  %s3 = inlined_call_operand.vmem [shape: bf16[60,10], index: 3, kind: input, shape index: {}]
  %s4 = inlined_call_operand.vmem [shape: f32[1,10], index: 4, kind: input, shape index: {}]
  %s5 = inlined_call_operand.vmem [shape: bf16[10,128], index: 5, kind: input, shape index: {}]
  %s6 = inlined_call_operand.<no memory space> [shape: f32[1,1], index: 6, kind: input, shape index: {}]
  %s7 = inlined_call_operand.hbm [shape: f32[8,128], index: 7, kind: output, shape index: {}]
  %s8 = sld [smem:[#allocation0]]
  $region38: #{tpu_custom_call.1} parent=0
    _
  %s10 = ssub.s32 1, %s8
  %s11 = scalar_select 0, %s10, %s8
  %12 = sst [smem:[#allocation2]] %s6
  $region1: #{tpu_custom_call.1} parent=0
    #allocation3 [shape = 'u8[4096]{0}', space=vmem, size = 0x1000, scoped, tag = 'output window, operand 0, single buffered']
    #allocation4 [shape = 's32[1]{0}', space=sflag, size = 0x4, scoped, tag = 'scoped memory for tpu_custom_call.1']
    %13 = vsyncpa [#allocation4], 0
    // Predicated region
    $region2: #{tpu_custom_call.1} parent=1 // pred_check
      _
    $region3: #{tpu_custom_call.1} parent=1 // pred_check_branch
      %15 = sbr.rel (0) target = $region5
    $region4: #{tpu_custom_call.1} parent=1 // pred_region
      _
    $region5: #{tpu_custom_call.1} parent=1 // pred_fallthru
      _
    // Predicated region
    $region6: #{tpu_custom_call.1} parent=1 // pred_check
      _
    $region7: #{tpu_custom_call.1} parent=1 // pred_check_branch
      %17 = sbr.rel (0) target = $region9
    $region8: #{tpu_custom_call.1} parent=1 // pred_region
      _
    $region9: #{tpu_custom_call.1} parent=1 // pred_fallthru
      _
    // Predicated region
    $region10: #{tpu_custom_call.1} parent=1 // pred_check
      _
    $region11: #{tpu_custom_call.1} parent=1 // pred_check_branch
      %19 = sbr.rel (0) target = $region13
    $region12: #{tpu_custom_call.1} parent=1 // pred_region
      _
    $region13: #{tpu_custom_call.1} parent=1 // pred_fallthru
      _
    // Predicated region
    $region14: #{tpu_custom_call.1} parent=1 // pred_check
      _
    $region15: #{tpu_custom_call.1} parent=1 // pred_check_branch
      %21 = sbr.rel (0) target = $region17
    $region16: #{tpu_custom_call.1} parent=1 // pred_region
      _
    $region17: #{tpu_custom_call.1} parent=1 // pred_fallthru
      _
    // Predicated region
    $region18: #{tpu_custom_call.1} parent=1 // pred_check
      _
    $region19: #{tpu_custom_call.1} parent=1 // pred_check_branch
      %23 = sbr.rel (0) target = $region21
    $region20: #{tpu_custom_call.1} parent=1 // pred_region
      _
    $region21: #{tpu_custom_call.1} parent=1 // pred_fallthru
      _
    // Predicated region
    $region22: #{tpu_custom_call.1} parent=1 // pred_check
      _
    $region23: #{tpu_custom_call.1} parent=1 // pred_check_branch
      %25 = sbr.rel (0) target = $region25
    $region24: #{tpu_custom_call.1} parent=1 // pred_region
      _
    $region25: #{tpu_custom_call.1} parent=1 // pred_fallthru
      _
    // Predicated region
    $region26: #{tpu_custom_call.1} parent=1 // pred_check
      _
    $region27: #{tpu_custom_call.1} parent=1 // pred_check_branch
      %27 = sbr.rel (0) target = $region29
    $region28: #{tpu_custom_call.1} parent=1 // pred_region
      _
    $region29: #{tpu_custom_call.1} parent=1 // pred_fallthru
      _
    %v29 = vld [vmem:[%s0] sm:$0xf]
    %v30 = vld [vmem:[%s1] sm:$0xf]
    %v31 = vld [vmem:[%s1 + $0x4] sm:$0xf]
    %v32 = vld [vmem:[%s1 + $0x8] sm:$0xf]
    %v33 = vld [vmem:[%s1 + $0xc] sm:$0xf]
    %v34 = vld [vmem:[%s2] sm:$0x1]
    %v36 = vlaneseq
    %v37 = vshrl.u32 %v36, 7
    %v38 = vsub.s32 0, %v37
    %v39 = vrot.slane %v34, %v38
    %v45 = vunpack.c.l.b16 %v30
    %v46 = vunpack.c.l.b16 %v31
    %v47 = vunpack.c.l.b16 %v32
    %v48 = vunpack.c.l.b16 %v33
    %v49 = vpack.c.b16 %v46, %v45
    %v50 = vpack.c.b16 %v48, %v47
    %vm53 = vcmask 261120
    %v55 = vsel %vm53, %v29, 0
    %57 = vmatprep.subr.bf16.mxu0 0
    %58 = vmatpush1.bf16.msra.mxu0 %v49
    %59 = vmatprep.subr.bf16.mxu0 0
    %60 = vmatpush1.bf16.msra.mxu0 %v50
    %61 = vmatprep.subr.bf16.mxu0 0
    %62 = vmatpush1.bf16.msra.mxu0 0
    %63 = vmatprep.subr.bf16.mxu0 0
    %64 = vmatpush1.bf16.msra.mxu0 0
    %65 = vmatprep.subr.bf16.mxu0 0
    %66 = vmatpush1.bf16.msra.mxu0 0
    %67 = vmatprep.subr.bf16.mxu0 0
    %68 = vmatpush1.bf16.msra.mxu0 0
    %69 = vmatprep.subr.bf16.mxu0 0
    %70 = vmatpush1.bf16.msra.mxu0 0
    %71 = vmatprep.subr.bf16.mxu0 0
    %72 = vmatpush1.bf16.msra.mxu0 0
    %73 = vmatprep.subr.bf16.mxu0 0
    %74 = vmatpush1.bf16.msra.mxu0 0
    %75 = vmatprep.subr.bf16.mxu0 0
    %76 = vmatpush1.bf16.msra.mxu0 0
    %77 = vmatprep.subr.bf16.mxu0 0
    %78 = vmatpush1.bf16.msra.mxu0 0
    %79 = vmatprep.subr.bf16.mxu0 0
    %80 = vmatpush1.bf16.msra.mxu0 0
    %81 = vmatprep.subr.bf16.mxu0 0
    %82 = vmatpush1.bf16.msra.mxu0 0
    %83 = vmatprep.subr.bf16.mxu0 0
    %84 = vmatpush1.bf16.msra.mxu0 0
    %85 = vmatprep.subr.bf16.mxu0 0
    %86 = vmatpush1.bf16.msra.mxu0 0
    %87 = vmatprep.subr.bf16.mxu0 0
    %88 = vmatpush1.bf16.msra.mxu0 0
    %89 = vmatprep.mubr.bf16.mxu0 0
    %90 = vmatmul.mubr.bf16.gmra.mrb[0].mxu0 %v55
    %v91 = vpop.f32.mrb[0].mxu0
    %v92 = vadd.f32 %v39, %v91
    %v93 = vpop.f32.mrb[0].mxu0
    %v94 = vpop.f32.mrb[0].mxu0
    %v95 = vpop.f32.mrb[0].mxu0
    %96 = vdwg.mxu0
    %vm97 = vcmp.gt.f32.partialorder %v92, 0.0
    %v98 = vmul.f32 %v92, 0.2
    %v99 = vsel %vm97, %v92, %v98
    %v100 = vpack.c.bf16 %v99, %v99
    %v101 = vld [vmem:[%s3] sm:$0xf]
    %v102 = vld [vmem:[%s3 + $0x4] sm:$0xf]
    %v103 = vld [vmem:[%s3 + $0x8] sm:$0xf]
    %v104 = vld [vmem:[%s3 + $0xc] sm:$0xf]
    %v105 = vld [vmem:[%s3 + $0x10] sm:$0xf]
    %v106 = vld [vmem:[%s3 + $0x14] sm:$0xf]
    %v107 = vld [vmem:[%s3 + $0x18] sm:$0xf]
    %v108 = vld [vmem:[%s3 + $0x1c] sm:$0x3]
    %v109 = vld [vmem:[%s4] sm:$0x1]
    %v111 = vlaneseq
    %v112 = vshrl.u32 %v111, 7
    %v113 = vsub.s32 0, %v112
    %v114 = vrot.slane %v109, %v113
    %v124 = vunpack.c.l.b16 %v101
    %v125 = vunpack.c.l.b16 %v102
    %v126 = vunpack.c.l.b16 %v103
    %v127 = vunpack.c.l.b16 %v104
    %v128 = vunpack.c.l.b16 %v105
    %v129 = vunpack.c.l.b16 %v106
    %v130 = vunpack.c.l.b16 %v107
    %v131 = vunpack.c.l.b16 %v108
    %v132 = vpack.c.b16 %v125, %v124
    %v133 = vpack.c.b16 %v127, %v126
    %v134 = vpack.c.b16 %v129, %v128
    %v135 = vpack.c.b16 %v131, %v130
    %vm139 = vcmask 490496
    %v141 = vsel %vm139, %v100, 0
    %vm143 = vcmask 1045504
    %v145 = vsel %vm143, %v135, 0
    %147 = vmatprep.subr.bf16.mxu0 0
    %148 = vmatpush1.bf16.msra.mxu0 %v132
    %149 = vmatprep.subr.bf16.mxu0 0
    %150 = vmatpush1.bf16.msra.mxu0 %v133
    %151 = vmatprep.subr.bf16.mxu0 0
    %152 = vmatpush1.bf16.msra.mxu0 %v134
    %153 = vmatprep.subr.bf16.mxu0 0
    %154 = vmatpush1.bf16.msra.mxu0 %v145
    %155 = vmatprep.subr.bf16.mxu0 0
    %156 = vmatpush1.bf16.msra.mxu0 0
    %157 = vmatprep.subr.bf16.mxu0 0
    %158 = vmatpush1.bf16.msra.mxu0 0
    %159 = vmatprep.subr.bf16.mxu0 0
    %160 = vmatpush1.bf16.msra.mxu0 0
    %161 = vmatprep.subr.bf16.mxu0 0
    %162 = vmatpush1.bf16.msra.mxu0 0
    %163 = vmatprep.subr.bf16.mxu0 0
    %164 = vmatpush1.bf16.msra.mxu0 0
    %165 = vmatprep.subr.bf16.mxu0 0
    %166 = vmatpush1.bf16.msra.mxu0 0
    %167 = vmatprep.subr.bf16.mxu0 0
    %168 = vmatpush1.bf16.msra.mxu0 0
    %169 = vmatprep.subr.bf16.mxu0 0
    %170 = vmatpush1.bf16.msra.mxu0 0
    %171 = vmatprep.subr.bf16.mxu0 0
    %172 = vmatpush1.bf16.msra.mxu0 0
    %173 = vmatprep.subr.bf16.mxu0 0
    %174 = vmatpush1.bf16.msra.mxu0 0
    %175 = vmatprep.subr.bf16.mxu0 0
    %176 = vmatpush1.bf16.msra.mxu0 0
    %177 = vmatprep.subr.bf16.mxu0 0
    %178 = vmatpush1.bf16.msra.mxu0 0
    %179 = vmatprep.mubr.bf16.mxu0 0
    %180 = vmatmul.mubr.bf16.gmra.mrb[0].mxu0 %v141
    %v181 = vpop.f32.mrb[0].mxu0
    %v182 = vadd.f32 %v114, %v181
    %v183 = vpop.f32.mrb[0].mxu0
    %v184 = vpop.f32.mrb[0].mxu0
    %v185 = vpop.f32.mrb[0].mxu0
    %186 = vdwg.mxu0
    %vm187 = vcmp.gt.f32.partialorder %v182, 0.0
    %v188 = vmul.f32 %v182, 0.2
    %v189 = vsel %vm187, %v182, %v188
    %v190 = vpack.c.bf16 %v189, %v189
    %v191 = vld [vmem:[%s5] sm:$0xf]
    %v192 = vld [vmem:[%s5 + $0x4] sm:$0x1]
    %s193 = sld [smem:[#allocation2]]
    %v194 = vstv %s193
    %v197 = vunpack.c.l.b16 %v191
    %v198 = vunpack.c.l.b16 %v192
    %v199 = vpack.c.b16 %v198, %v197
    %vm200 = vcmask 80896
    %v202 = vsel %vm200, %v190, 0
    %vm204 = vcmask 1044480
    %v206 = vsel %vm204, %v199, 0
    %208 = vmatprep.subr.bf16.mxu0 0
    %209 = vmatpush1.bf16.msra.mxu0 %v206
    %210 = vmatprep.subr.bf16.mxu0 0
    %211 = vmatpush1.bf16.msra.mxu0 0
    %212 = vmatprep.subr.bf16.mxu0 0
    %213 = vmatpush1.bf16.msra.mxu0 0
    %214 = vmatprep.subr.bf16.mxu0 0
    %215 = vmatpush1.bf16.msra.mxu0 0
    %216 = vmatprep.subr.bf16.mxu0 0
    %217 = vmatpush1.bf16.msra.mxu0 0
    %218 = vmatprep.subr.bf16.mxu0 0
    %219 = vmatpush1.bf16.msra.mxu0 0
    %220 = vmatprep.subr.bf16.mxu0 0
    %221 = vmatpush1.bf16.msra.mxu0 0
    %222 = vmatprep.subr.bf16.mxu0 0
    %223 = vmatpush1.bf16.msra.mxu0 0
    %224 = vmatprep.subr.bf16.mxu0 0
    %225 = vmatpush1.bf16.msra.mxu0 0
    %226 = vmatprep.subr.bf16.mxu0 0
    %227 = vmatpush1.bf16.msra.mxu0 0
    %228 = vmatprep.subr.bf16.mxu0 0
    %229 = vmatpush1.bf16.msra.mxu0 0
    %230 = vmatprep.subr.bf16.mxu0 0
    %231 = vmatpush1.bf16.msra.mxu0 0
    %232 = vmatprep.subr.bf16.mxu0 0
    %233 = vmatpush1.bf16.msra.mxu0 0
    %234 = vmatprep.subr.bf16.mxu0 0
    %235 = vmatpush1.bf16.msra.mxu0 0
    %236 = vmatprep.subr.bf16.mxu0 0
    %237 = vmatpush1.bf16.msra.mxu0 0
    %238 = vmatprep.subr.bf16.mxu0 0
    %239 = vmatpush1.bf16.msra.mxu0 0
    %240 = vmatprep.mubr.bf16.mxu0 0
    %241 = vmatmul.mubr.bf16.gmra.mrb[0].mxu0 %v202
    %v242 = vpop.f32.mrb[0].mxu0
    %v243 = vadd.f32 %v194, %v242
    %v244 = vpop.f32.mrb[0].mxu0
    %v245 = vpop.f32.mrb[0].mxu0
    %v246 = vpop.f32.mrb[0].mxu0
    %247 = vdwg.mxu0
    %248 = vst [vmem:[#allocation3] sm:$0xff] %v243
    // Predicated region
    $region30: #{tpu_custom_call.1} parent=1 // pred_check
      _
    $region31: #{tpu_custom_call.1} parent=1 // pred_check_branch
      %250 = sbr.rel (0) target = $region33
    $region32: #{tpu_custom_call.1} parent=1 // pred_region
      %s252 = ssub.s32 128, 128
      %253 = vsyncadd [#allocation4], %s252
      %s255 = sshll.u32 [#allocation3], 4
      %s256 = int_to_ptr.vmem [resolvable:$true] %s255
      %258 = dma.vmem_to_hbm [thread:$0]  %s256, 128, %s7, [#allocation4]
    $region33: #{tpu_custom_call.1} parent=1 // pred_fallthru
      _
    // Predicated region
    $region34: #{tpu_custom_call.1} parent=1 // pred_check
      _
    $region35: #{tpu_custom_call.1} parent=1 // pred_check_branch
      %260 = sbr.rel (0) target = $region37
    $region36: #{tpu_custom_call.1} parent=1 // pred_region
      %261 = dma.done [#allocation4], 128
    $region37: #{tpu_custom_call.1} parent=1 // pred_fallthru
      _
    %262 = vsyncpa [#allocation4], 1

</llo_original>
